<compile_context>
chip_gen: v6e
topology: v6e:2x2x1
jax: 0.10.0
libtpu: 0.0.40
codegen_flags: <defaults>
</compile_context>

<pallas_src>
import jax
import jax.numpy as jnp
from jax.experimental import pallas as pl
from jax.experimental.pallas import tpu as pltpu

EPS = 1e-5  # nn.LayerNorm default


# --------------------------------------------------------------------------
# Kernels
# --------------------------------------------------------------------------
def _patch_expand_kernel(x_ref, wT3_ref, gamma_ref, beta_ref, o_ref):
    # x_ref: (TM, C); wT3_ref: (4, C, C) chunk-major (in, out);
    # gamma/beta: (1, C); o_ref: (TM, 4C)
    C = x_ref.shape[1]
    inv_c = 1.0 / C
    x = x_ref[...]                                        # native dtype -> MXU
    gamma = gamma_ref[...].astype(jnp.float32)            # hoisted out of loop
    beta = beta_ref[...].astype(jnp.float32)

    # Static unroll over the 4 output chunks: per-chunk matmul keeps the live
    # f32 intermediate at (TM, C) and lets LN overlap the next chunk's MXU.
    for k in range(4):
        z = jnp.dot(x, wT3_ref[k], preferred_element_type=jnp.float32)  # (TM, C)
        mean = jnp.sum(z, axis=-1, keepdims=True) * inv_c
        zc = z - mean
        var = jnp.sum(zc * zc, axis=-1, keepdims=True) * inv_c          # two-pass
        zn = zc * jax.lax.rsqrt(var + EPS)                               # EUP
        # For C % 128 != 0 the k*C offset is a lane-shuffled (masked) store;
        # the DMA to HBM stays dense in the 4C lane dim.
        o_ref[:, k * C:(k + 1) * C] = (zn * gamma + beta).astype(o_ref.dtype)


def _patch_expand_chunk_kernel(x_ref, wT3_ref, gamma_ref, beta_ref, o_ref):
    # Split path: x_ref (TM, C); wT3_ref (1, C, C); gamma/beta (1, C);
    # o_ref (TM, C) — one lane-aligned chunk of the (M, 4C) output.
    C = x_ref.shape[1]
    inv_c = 1.0 / C
    z = jnp.dot(x_ref[...], wT3_ref[0], preferred_element_type=jnp.float32)
    mean = jnp.sum(z, axis=-1, keepdims=True) * inv_c
    zc = z - mean
    var = jnp.sum(zc * zc, axis=-1, keepdims=True) * inv_c
    zn = zc * jax.lax.rsqrt(var + EPS)
    o_ref[...] = (zn * gamma_ref[...].astype(jnp.float32)
                  + beta_ref[...].astype(jnp.float32)).astype(o_ref.dtype)


# --------------------------------------------------------------------------
# Wrapper helpers
# --------------------------------------------------------------------------
def prepare_patch_expand_weight(w):
    """One-time (init) conversion of the PyTorch (4C, C) Linear weight into
    chunk-major (4, C, C) with (in, out) layout per chunk.  Doing this once at
    parameter-setup time keeps the per-call hot path free of a full weight
    transpose (an HBM round trip)."""
    C4, C = w.shape
    assert C4 == 4 * C, "expected nn.Linear(dim, 4*dim) weight of shape (4C, C)"
    return jnp.swapaxes(w.reshape(4, C, C), 1, 2)


def _vmem_capacity_bytes():
    try:
        cap = int(pltpu.get_tpu_info().vmem_capacity_bytes)
        if cap > 0:
            return cap
    except Exception:
        pass
    return 64 << 20  # conservative fallback: v7x per-TensorCore VMEM


def _pick_row_tile(M, target):
    """Pick (tm, m_pad).  Prefer a sublane-aligned divisor of M near the
    target so no jnp.pad copy of x is needed; otherwise pad."""
    target = max(8, target)
    if M <= target:
        return M, M                                     # single tile, no pad
    lo = max(8, min(target, max(128, target // 2)))
    t = (target // 8) * 8
    while t >= lo:
        if M % t == 0:
            return t, M                                 # exact tiling, no pad
        t -= 8
    # Fall back to padding with an MXU/lane-friendly tile.
    tm = (target // 128) * 128 if target >= 128 else (target // 8) * 8
    tm = max(8, tm)
    return tm, pl.cdiv(M, tm) * tm


# --------------------------------------------------------------------------
# Public entry point
# --------------------------------------------------------------------------
def patch_expand(x, w, gamma, beta, *, tm=None, vmem_limit_bytes=None):
    """x: (B, L, C); w: (4C, C) PyTorch Linear weight OR pre-prepared (4, C, C)
    from prepare_patch_expand_weight(); gamma/beta: (C,)."""
    B, L, C = x.shape
    C4 = 4 * C
    M = B * L

    if w.ndim == 2:
        # Prefer pre-converting once at init; done here only as a convenience.
        wT3 = prepare_patch_expand_weight(w)
    else:
        assert w.shape == (4, C, C)
        wT3 = w

    x2 = x.reshape(M, C)
    g2 = gamma.reshape(1, C)
    b2 = beta.reshape(1, C)

    in_bytes = jnp.dtype(x.dtype).itemsize
    w_bytes = jnp.dtype(wT3.dtype).itemsize
    out_bytes = in_bytes

    # ---- generation-aware VMEM budget --------------------------------------
    cap = _vmem_capacity_bytes()            # 128 MiB (v5e/v6e) or 64 MiB (v7x)
    budget = (3 * cap) // 4                 # leave headroom for Mosaic scratch

    # Pallas double-buffers blocks even when their index never changes.
    w_full_resident = 2 * 4 * C * C * w_bytes
    w_chunk_resident = 2 * C * C * w_bytes

    # Split the 4 output chunks over an OUTER grid axis only when the full
    # weight would not comfortably fit in VMEM.  Requires C % 128 == 0 so the
    # per-chunk output blocks stay lane-aligned (true for the large swin dims
    # that ever trigger this).
    split_chunks = (C % 128 == 0) and (w_full_resident > budget // 3)
    # TODO(synk): very large C with C % 128 != 0 still uses the resident-weight
    # path with a small row tile; no chunk-split escape hatch for that class.

    if split_chunks:
        weight_resident = w_chunk_resident
        per_row = 2 * C * in_bytes + 2 * C * out_bytes + 2 * C * 4
    else:
        weight_resident = w_full_resident
        # per-chunk matmul -> only one (tm, C) f32 intermediate live at a time
        per_row = 2 * C * in_bytes + 2 * C4 * out_bytes + 2 * C * 4

    tm_cap = 1024 if budget >= (64 << 20) else 512

    if tm is None:
        avail = max(budget - weight_resident, per_row * 8)
        target = max(8, min(tm_cap, avail // per_row))
        tm, m_pad = _pick_row_tile(M, target)
    else:
        tm = max(1, min(tm, M))
        m_pad = pl.cdiv(M, tm) * tm

    if m_pad != M:
        # Padded rows are all-zero -> LN gives finite values; dropped below.
        x2 = jnp.pad(x2, ((0, m_pad - M), (0, 0)))

    if vmem_limit_bytes is None:
        need = weight_resident + tm * per_row + 8 * C * 4
        vmem_limit_bytes = int(min(max(int(need * 1.25), 32 << 20), cap))

    # Actual traffic: split path re-reads x once per chunk; weight read once.
    x_reads = 4 if split_chunks else 1
    cost = pl.CostEstimate(
        flops=2 * m_pad * C * C4,
        transcendentals=4 * m_pad,                       # one rsqrt per out row
        bytes_accessed=(x_reads * m_pad * C * in_bytes
                        + 4 * C * C * w_bytes
                        + 2 * C * 4
                        + m_pad * C4 * out_bytes),
    )

    if split_chunks:
        out = pl.pallas_call(
            _patch_expand_chunk_kernel,
            out_shape=jax.ShapeDtypeStruct((m_pad, C4), x.dtype),
            grid_spec=pltpu.PrefetchScalarGridSpec(
                num_scalar_prefetch=0,
                grid=(4, m_pad // tm),        # chunk axis OUTER: weight chunk
                in_specs=[                    # is DMA'd 4x total, not 4x(M/tm)
                    pl.BlockSpec((tm, C), lambda k, i: (i, 0)),
                    pl.BlockSpec((1, C, C), lambda k, i: (k, 0, 0)),
                    pl.BlockSpec((1, C), lambda k, i: (0, 0)),
                    pl.BlockSpec((1, C), lambda k, i: (0, 0)),
                ],
                out_specs=pl.BlockSpec((tm, C), lambda k, i: (i, k)),
            ),
            compiler_params=pltpu.CompilerParams(
                dimension_semantics=("arbitrary", "parallel"),
                vmem_limit_bytes=vmem_limit_bytes),
            cost_estimate=cost,
        )(x2, wT3, g2, b2)
    else:
        out = pl.pallas_call(
            _patch_expand_kernel,
            out_shape=jax.ShapeDtypeStruct((m_pad, C4), x.dtype),
            grid_spec=pltpu.PrefetchScalarGridSpec(
                num_scalar_prefetch=0,
                grid=(m_pad // tm,),
                in_specs=[
                    pl.BlockSpec((tm, C), lambda i: (i, 0)),
                    pl.BlockSpec((4, C, C), lambda i: (0, 0, 0)),  # resident
                    pl.BlockSpec((1, C), lambda i: (0, 0)),
                    pl.BlockSpec((1, C), lambda i: (0, 0)),
                ],
                out_specs=pl.BlockSpec((tm, C4), lambda i: (i, 0)),
            ),
            compiler_params=pltpu.CompilerParams(
                dimension_semantics=("parallel",),
                vmem_limit_bytes=vmem_limit_bytes),
            cost_estimate=cost,
        )(x2, wT3, g2, b2)

    if m_pad != M:
        out = out[:M]
    # view(B, -1, C) of the (B, L, 4C) expansion -> (B, 4L, C); pure reshape.
    return out.reshape(B, 4 * L, C)


# --------------------------------------------------------------------------
# Pure-JAX reference and test
# --------------------------------------------------------------------------
def patch_expand_ref(x, w, gamma, beta):
    B, L, C = x.shape
    y = jnp.einsum("blc,dc->bld", x, w)        # Linear, no bias
    z = y.reshape(B, 4 * L, C)
    mean = z.mean(-1, keepdims=True)
    var = ((z - mean) ** 2).mean(-1, keepdims=True)
    return (z - mean) / jnp.sqrt(var + EPS) * gamma + beta


if __name__ == "__main__":
    B, L, C = 2, 8, 32  # input_len = L, dim = C

    key = jax.random.PRNGKey(0)
    kx, kw, kg, kb = jax.random.split(key, 4)
    x = jax.random.normal(kx, (B, L, C), dtype=jnp.float32)
    # nn.Linear(dim, 4*dim, bias=False) weight: (4C, C)
    w = jax.random.normal(kw, (4 * C, C), dtype=jnp.float32) * (1.0 / C**0.5)
    # nn.LayerNorm(dim) params (randomized deterministically to exercise path)
    gamma = 1.0 + 0.1 * jax.random.normal(kg, (C,), dtype=jnp.float32)
    beta = 0.1 * jax.random.normal(kb, (C,), dtype=jnp.float32)

    # Init-time weight prep (hoists the weight transpose out of the hot path).
    wT3 = prepare_patch_expand_weight(w)

    out = patch_expand(x, wT3, gamma, beta)
    out = jax.block_until_ready(out)

    ref = patch_expand_ref(x, w, gamma, beta)
    assert out.shape == (B, 4 * L, C)
    assert jnp.allclose(out, ref, atol=1e-5, rtol=1e-5)
    print("KERNEL_OK")
</pallas_src>

<mosaic_0001>
module attributes {stable_mosaic.version = 11 : i64} {
  func.func @_patch_expand_kernel(%arg0: i32, %arg1: memref<16x32xf32, #tpu.memory_space<vmem>>, %arg2: memref<4x32x32xf32, #tpu.memory_space<vmem>>, %arg3: memref<1x32xf32, #tpu.memory_space<vmem>>, %arg4: memref<1x32xf32, #tpu.memory_space<vmem>>, %arg5: memref<16x128xf32, #tpu.memory_space<vmem>>) attributes {dimension_semantics = [#tpu.dimension_semantics<parallel>], iteration_bounds = array<i64: 1>, scalar_prefetch = 0 : i64, scratch_operands = 0 : i64, tpu.core_type = #tpu.core_type<tc>, window_params = [{transform_indices = @transform_0, window_bounds = array<i64: 16, 32>}, {pipeline_mode = #tpu.pipeline_mode<synchronous>, transform_indices = @transform_1, window_bounds = array<i64: 4, 32, 32>}, {pipeline_mode = #tpu.pipeline_mode<synchronous>, transform_indices = @transform_2, window_bounds = array<i64: 1, 32>}, {pipeline_mode = #tpu.pipeline_mode<synchronous>, transform_indices = @transform_3, window_bounds = array<i64: 1, 32>}, {transform_indices = @transform_4, window_bounds = array<i64: 16, 128>}]} {
    %c0 = arith.constant 0 : index
    %c0_0 = arith.constant 0 : index
    %0 = vector.load %arg1[%c0, %c0_0] : memref<16x32xf32, #tpu.memory_space<vmem>>, vector<16x32xf32>
    %c0_1 = arith.constant 0 : index
    %c0_2 = arith.constant 0 : index
    %1 = vector.load %arg3[%c0_1, %c0_2] : memref<1x32xf32, #tpu.memory_space<vmem>>, vector<1x32xf32>
    %c0_3 = arith.constant 0 : index
    %c0_4 = arith.constant 0 : index
    %2 = vector.load %arg4[%c0_3, %c0_4] : memref<1x32xf32, #tpu.memory_space<vmem>>, vector<1x32xf32>
    %c0_5 = arith.constant 0 : index
    %c0_6 = arith.constant 0 : index
    %c0_7 = arith.constant 0 : index
    %3 = vector.load %arg2[%c0_5, %c0_6, %c0_7] : memref<4x32x32xf32, #tpu.memory_space<vmem>>, vector<1x32x32xf32>
    %4 = vector.shape_cast %3 : vector<1x32x32xf32> to vector<32x32xf32>
    %cst = arith.constant dense<0.000000e+00> : vector<16x32xf32>
    %5 = tpu.matmul %0, %4, %cst {dimension_numbers = #tpu.dot_dimension_numbers<[1], [0], [0], [1], [0, 0, 1, 1], [], []>} : vector<16x32xf32>, vector<32x32xf32>, vector<16x32xf32> -> vector<16x32xf32>
    %cst_8 = arith.constant dense<0.000000e+00> : vector<16xf32>
    %6 = vector.multi_reduction <add>, %5, %cst_8 [1] : vector<16x32xf32> to vector<16xf32>
    %7 = vector.shape_cast %6 : vector<16xf32> to vector<16x1xf32>
    %cst_9 = arith.constant 3.125000e-02 : f32
    %8 = vector.broadcast %cst_9 : f32 to vector<16x1xf32>
    %9 = arith.mulf %7, %8 : vector<16x1xf32>
    %10 = vector.broadcast %9 : vector<16x1xf32> to vector<16x32xf32>
    %11 = arith.subf %5, %10 : vector<16x32xf32>
    %12 = arith.mulf %11, %11 : vector<16x32xf32>
    %cst_10 = arith.constant dense<0.000000e+00> : vector<16xf32>
    %13 = vector.multi_reduction <add>, %12, %cst_10 [1] : vector<16x32xf32> to vector<16xf32>
    %14 = vector.shape_cast %13 : vector<16xf32> to vector<16x1xf32>
    %cst_11 = arith.constant 3.125000e-02 : f32
    %15 = vector.broadcast %cst_11 : f32 to vector<16x1xf32>
    %16 = arith.mulf %14, %15 : vector<16x1xf32>
    %cst_12 = arith.constant 9.99999974E-6 : f32
    %17 = vector.broadcast %cst_12 : f32 to vector<16x1xf32>
    %18 = arith.addf %16, %17 : vector<16x1xf32>
    %19 = math.rsqrt %18 : vector<16x1xf32>
    %20 = vector.broadcast %19 : vector<16x1xf32> to vector<16x32xf32>
    %21 = arith.mulf %11, %20 : vector<16x32xf32>
    %22 = vector.broadcast %1 : vector<1x32xf32> to vector<16x32xf32>
    %23 = arith.mulf %21, %22 : vector<16x32xf32>
    %24 = vector.broadcast %2 : vector<1x32xf32> to vector<16x32xf32>
    %25 = arith.addf %23, %24 : vector<16x32xf32>
    %c0_13 = arith.constant 0 : index
    %c0_14 = arith.constant 0 : index
    %26 = vector.load %arg5[%c0_13, %c0_14] : memref<16x128xf32, #tpu.memory_space<vmem>>, vector<16x32xf32>
    tpu.vector_store %arg5[%c0_13, %c0_14], %25 {strides = array<i32>} : memref<16x128xf32, #tpu.memory_space<vmem>>, vector<16x32xf32>,
    %c1 = arith.constant 1 : index
    %c0_15 = arith.constant 0 : index
    %c0_16 = arith.constant 0 : index
    %27 = vector.load %arg2[%c1, %c0_15, %c0_16] : memref<4x32x32xf32, #tpu.memory_space<vmem>>, vector<1x32x32xf32>
    %28 = vector.shape_cast %27 : vector<1x32x32xf32> to vector<32x32xf32>
    %cst_17 = arith.constant dense<0.000000e+00> : vector<16x32xf32>
    %29 = tpu.matmul %0, %28, %cst_17 {dimension_numbers = #tpu.dot_dimension_numbers<[1], [0], [0], [1], [0, 0, 1, 1], [], []>} : vector<16x32xf32>, vector<32x32xf32>, vector<16x32xf32> -> vector<16x32xf32>
    %cst_18 = arith.constant dense<0.000000e+00> : vector<16xf32>
    %30 = vector.multi_reduction <add>, %29, %cst_18 [1] : vector<16x32xf32> to vector<16xf32>
    %31 = vector.shape_cast %30 : vector<16xf32> to vector<16x1xf32>
    %cst_19 = arith.constant 3.125000e-02 : f32
    %32 = vector.broadcast %cst_19 : f32 to vector<16x1xf32>
    %33 = arith.mulf %31, %32 : vector<16x1xf32>
    %34 = vector.broadcast %33 : vector<16x1xf32> to vector<16x32xf32>
    %35 = arith.subf %29, %34 : vector<16x32xf32>
    %36 = arith.mulf %35, %35 : vector<16x32xf32>
    %cst_20 = arith.constant dense<0.000000e+00> : vector<16xf32>
    %37 = vector.multi_reduction <add>, %36, %cst_20 [1] : vector<16x32xf32> to vector<16xf32>
    %38 = vector.shape_cast %37 : vector<16xf32> to vector<16x1xf32>
    %cst_21 = arith.constant 3.125000e-02 : f32
    %39 = vector.broadcast %cst_21 : f32 to vector<16x1xf32>
    %40 = arith.mulf %38, %39 : vector<16x1xf32>
    %cst_22 = arith.constant 9.99999974E-6 : f32
    %41 = vector.broadcast %cst_22 : f32 to vector<16x1xf32>
    %42 = arith.addf %40, %41 : vector<16x1xf32>
    %43 = math.rsqrt %42 : vector<16x1xf32>
    %44 = vector.broadcast %43 : vector<16x1xf32> to vector<16x32xf32>
    %45 = arith.mulf %35, %44 : vector<16x32xf32>
    %46 = vector.broadcast %1 : vector<1x32xf32> to vector<16x32xf32>
    %47 = arith.mulf %45, %46 : vector<16x32xf32>
    %48 = vector.broadcast %2 : vector<1x32xf32> to vector<16x32xf32>
    %49 = arith.addf %47, %48 : vector<16x32xf32>
    %c0_23 = arith.constant 0 : index
    %c32 = arith.constant 32 : index
    %50 = vector.load %arg5[%c0_23, %c32] : memref<16x128xf32, #tpu.memory_space<vmem>>, vector<16x32xf32>
    tpu.vector_store %arg5[%c0_23, %c32], %49 {strides = array<i32>} : memref<16x128xf32, #tpu.memory_space<vmem>>, vector<16x32xf32>,
    %c2 = arith.constant 2 : index
    %c0_24 = arith.constant 0 : index
    %c0_25 = arith.constant 0 : index
    %51 = vector.load %arg2[%c2, %c0_24, %c0_25] : memref<4x32x32xf32, #tpu.memory_space<vmem>>, vector<1x32x32xf32>
    %52 = vector.shape_cast %51 : vector<1x32x32xf32> to vector<32x32xf32>
    %cst_26 = arith.constant dense<0.000000e+00> : vector<16x32xf32>
    %53 = tpu.matmul %0, %52, %cst_26 {dimension_numbers = #tpu.dot_dimension_numbers<[1], [0], [0], [1], [0, 0, 1, 1], [], []>} : vector<16x32xf32>, vector<32x32xf32>, vector<16x32xf32> -> vector<16x32xf32>
    %cst_27 = arith.constant dense<0.000000e+00> : vector<16xf32>
    %54 = vector.multi_reduction <add>, %53, %cst_27 [1] : vector<16x32xf32> to vector<16xf32>
    %55 = vector.shape_cast %54 : vector<16xf32> to vector<16x1xf32>
    %cst_28 = arith.constant 3.125000e-02 : f32
    %56 = vector.broadcast %cst_28 : f32 to vector<16x1xf32>
    %57 = arith.mulf %55, %56 : vector<16x1xf32>
    %58 = vector.broadcast %57 : vector<16x1xf32> to vector<16x32xf32>
    %59 = arith.subf %53, %58 : vector<16x32xf32>
    %60 = arith.mulf %59, %59 : vector<16x32xf32>
    %cst_29 = arith.constant dense<0.000000e+00> : vector<16xf32>
    %61 = vector.multi_reduction <add>, %60, %cst_29 [1] : vector<16x32xf32> to vector<16xf32>
    %62 = vector.shape_cast %61 : vector<16xf32> to vector<16x1xf32>
    %cst_30 = arith.constant 3.125000e-02 : f32
    %63 = vector.broadcast %cst_30 : f32 to vector<16x1xf32>
    %64 = arith.mulf %62, %63 : vector<16x1xf32>
    %cst_31 = arith.constant 9.99999974E-6 : f32
    %65 = vector.broadcast %cst_31 : f32 to vector<16x1xf32>
    %66 = arith.addf %64, %65 : vector<16x1xf32>
    %67 = math.rsqrt %66 : vector<16x1xf32>
    %68 = vector.broadcast %67 : vector<16x1xf32> to vector<16x32xf32>
    %69 = arith.mulf %59, %68 : vector<16x32xf32>
    %70 = vector.broadcast %1 : vector<1x32xf32> to vector<16x32xf32>
    %71 = arith.mulf %69, %70 : vector<16x32xf32>
    %72 = vector.broadcast %2 : vector<1x32xf32> to vector<16x32xf32>
    %73 = arith.addf %71, %72 : vector<16x32xf32>
    %c0_32 = arith.constant 0 : index
    %c64 = arith.constant 64 : index
    %74 = vector.load %arg5[%c0_32, %c64] : memref<16x128xf32, #tpu.memory_space<vmem>>, vector<16x32xf32>
    tpu.vector_store %arg5[%c0_32, %c64], %73 {strides = array<i32>} : memref<16x128xf32, #tpu.memory_space<vmem>>, vector<16x32xf32>,
    %c3 = arith.constant 3 : index
    %c0_33 = arith.constant 0 : index
    %c0_34 = arith.constant 0 : index
    %75 = vector.load %arg2[%c3, %c0_33, %c0_34] : memref<4x32x32xf32, #tpu.memory_space<vmem>>, vector<1x32x32xf32>
    %76 = vector.shape_cast %75 : vector<1x32x32xf32> to vector<32x32xf32>
    %cst_35 = arith.constant dense<0.000000e+00> : vector<16x32xf32>
    %77 = tpu.matmul %0, %76, %cst_35 {dimension_numbers = #tpu.dot_dimension_numbers<[1], [0], [0], [1], [0, 0, 1, 1], [], []>} : vector<16x32xf32>, vector<32x32xf32>, vector<16x32xf32> -> vector<16x32xf32>
    %cst_36 = arith.constant dense<0.000000e+00> : vector<16xf32>
    %78 = vector.multi_reduction <add>, %77, %cst_36 [1] : vector<16x32xf32> to vector<16xf32>
    %79 = vector.shape_cast %78 : vector<16xf32> to vector<16x1xf32>
    %cst_37 = arith.constant 3.125000e-02 : f32
    %80 = vector.broadcast %cst_37 : f32 to vector<16x1xf32>
    %81 = arith.mulf %79, %80 : vector<16x1xf32>
    %82 = vector.broadcast %81 : vector<16x1xf32> to vector<16x32xf32>
    %83 = arith.subf %77, %82 : vector<16x32xf32>
    %84 = arith.mulf %83, %83 : vector<16x32xf32>
    %cst_38 = arith.constant dense<0.000000e+00> : vector<16xf32>
    %85 = vector.multi_reduction <add>, %84, %cst_38 [1] : vector<16x32xf32> to vector<16xf32>
    %86 = vector.shape_cast %85 : vector<16xf32> to vector<16x1xf32>
    %cst_39 = arith.constant 3.125000e-02 : f32
    %87 = vector.broadcast %cst_39 : f32 to vector<16x1xf32>
    %88 = arith.mulf %86, %87 : vector<16x1xf32>
    %cst_40 = arith.constant 9.99999974E-6 : f32
    %89 = vector.broadcast %cst_40 : f32 to vector<16x1xf32>
    %90 = arith.addf %88, %89 : vector<16x1xf32>
    %91 = math.rsqrt %90 : vector<16x1xf32>
    %92 = vector.broadcast %91 : vector<16x1xf32> to vector<16x32xf32>
    %93 = arith.mulf %83, %92 : vector<16x32xf32>
    %94 = vector.broadcast %1 : vector<1x32xf32> to vector<16x32xf32>
    %95 = arith.mulf %93, %94 : vector<16x32xf32>
    %96 = vector.broadcast %2 : vector<1x32xf32> to vector<16x32xf32>
    %97 = arith.addf %95, %96 : vector<16x32xf32>
    %c0_41 = arith.constant 0 : index
    %c96 = arith.constant 96 : index
    %98 = vector.load %arg5[%c0_41, %c96] : memref<16x128xf32, #tpu.memory_space<vmem>>, vector<16x32xf32>
    tpu.vector_store %arg5[%c0_41, %c96], %97 {strides = array<i32>} : memref<16x128xf32, #tpu.memory_space<vmem>>, vector<16x32xf32>,
    return
  }
  func.func @transform_0(%arg0: i32) -> (i32, i32) {
    %c0_i32 = arith.constant 0 : i32
    %c0_i32_0 = arith.constant 0 : i32
    return %arg0, %c0_i32 : i32, i32
  }
  func.func @transform_1(%arg0: i32) -> (i32, i32, i32) {
    %c0_i32 = arith.constant 0 : i32
    %c0_i32_0 = arith.constant 0 : i32
    %c0_i32_1 = arith.constant 0 : i32
    %c0_i32_2 = arith.constant 0 : i32
    return %c0_i32, %c0_i32_0, %c0_i32_1 : i32, i32, i32
  }
  func.func @transform_2(%arg0: i32) -> (i32, i32) {
    %c0_i32 = arith.constant 0 : i32
    %c0_i32_0 = arith.constant 0 : i32
    %c0_i32_1 = arith.constant 0 : i32
    return %c0_i32, %c0_i32_0 : i32, i32
  }
  func.func @transform_3(%arg0: i32) -> (i32, i32) {
    %c0_i32 = arith.constant 0 : i32
    %c0_i32_0 = arith.constant 0 : i32
    %c0_i32_1 = arith.constant 0 : i32
    return %c0_i32, %c0_i32_0 : i32, i32
  }
  func.func @transform_4(%arg0: i32) -> (i32, i32) {
    %c0_i32 = arith.constant 0 : i32
    %c0_i32_0 = arith.constant 0 : i32
    return %arg0, %c0_i32 : i32, i32
  }
}

</mosaic_0001>

<llo_original>
// kernel: tpu_custom_call.1
$region0: #{tpu_custom_call.1}
  #allocation0 [shape = 'u32[]', space=smem, size = 0x4, offset = 0x4, fixed_abs, tag = 'smem constant byte address 0x4 - core index']
  #allocation1 [shape = 'u32[144,128]{1,0:T(1,128)}', space=vmem, size = 0x12000, scoped, tag = 'internal scratch']
  %s0 = inlined_call_operand.hbm [shape: f32[16,32], index: 0, kind: input, shape index: {}]
  %s1 = inlined_call_operand.hbm [shape: f32[4,32,32], index: 1, kind: input, shape index: {}]
  %s2 = inlined_call_operand.vmem [shape: f32[1,32], index: 2, kind: input, shape index: {}]
  %s3 = inlined_call_operand.vmem [shape: f32[1,32], index: 3, kind: input, shape index: {}]
  %s4 = inlined_call_operand.hbm [shape: f32[16,128], index: 4, kind: output, shape index: {}]
  %s5 = sld [smem:[#allocation0]]
  $region34: #{tpu_custom_call.1} parent=0
    _
  %s7 = ssub.s32 1, %s5
  %s8 = scalar_select 0, %s7, %s5
  $region1: #{tpu_custom_call.1} parent=0
    #allocation2 [shape = 'u8[8192]{0}', space=vmem, size = 0x2000, scoped, tag = 'input window, operand 0, single buffered']
    #allocation3 [shape = 's32[1]{0}', space=sflag, size = 0x4, scoped, tag = 'scoped memory for tpu_custom_call.1']
    #allocation4 [shape = 's32[1]{0}', space=sflag, size = 0x4, scoped, tag = 'scoped memory for tpu_custom_call.1']
    #allocation5 [shape = 'u8[65536]{0}', space=vmem, size = 0x10000, scoped, tag = 'input window, operand 1, single buffered']
    #allocation6 [shape = 's32[1]{0}', space=sflag, size = 0x4, scoped, tag = 'scoped memory for tpu_custom_call.1']
    #allocation7 [shape = 'u8[8192]{0}', space=vmem, size = 0x2000, scoped, tag = 'output window, operand 0, single buffered']
    %9 = vsyncpa [#allocation3], 0
    %10 = vsyncpa [#allocation6], 0
    %11 = vsyncpa [#allocation4], 0
    // Predicated region
    $region2: #{tpu_custom_call.1} parent=1 // pred_check
      _
    $region3: #{tpu_custom_call.1} parent=1 // pred_check_branch
      %13 = sbr.rel (0) target = $region5
    $region4: #{tpu_custom_call.1} parent=1 // pred_region
      %s15 = ssub.s32 256, 256
      %16 = vsyncadd [#allocation3], %s15
      %s17 = sshll.u32 [#allocation2], 4
      %s18 = int_to_ptr.vmem [resolvable:$true] %s17
      %23 = dma.hbm_to_vmem [thread:$0]  %s0, 256, %s18, [#allocation3], 128, 128, 8
    $region5: #{tpu_custom_call.1} parent=1 // pred_fallthru
      _
    // Predicated region
    $region6: #{tpu_custom_call.1} parent=1 // pred_check
      _
    $region7: #{tpu_custom_call.1} parent=1 // pred_check_branch
      %25 = sbr.rel (0) target = $region9
    $region8: #{tpu_custom_call.1} parent=1 // pred_region
      %s27 = ssub.s32 2048, 2048
      %28 = vsyncadd [#allocation6], %s27
      %s29 = sshll.u32 [#allocation5], 4
      %s30 = int_to_ptr.vmem [resolvable:$true] %s29
      %35 = dma.hbm_to_vmem [thread:$0]  %s1, 2048, %s30, [#allocation6], 128, 128, 8
    $region9: #{tpu_custom_call.1} parent=1 // pred_fallthru
      _
    // Predicated region
    $region10: #{tpu_custom_call.1} parent=1 // pred_check
      _
    $region11: #{tpu_custom_call.1} parent=1 // pred_check_branch
      %37 = sbr.rel (0) target = $region13
    $region12: #{tpu_custom_call.1} parent=1 // pred_region
      _
    $region13: #{tpu_custom_call.1} parent=1 // pred_fallthru
      _
    // Predicated region
    $region14: #{tpu_custom_call.1} parent=1 // pred_check
      _
    $region15: #{tpu_custom_call.1} parent=1 // pred_check_branch
      %39 = sbr.rel (0) target = $region17
    $region16: #{tpu_custom_call.1} parent=1 // pred_region
      _
    $region17: #{tpu_custom_call.1} parent=1 // pred_fallthru
      _
    // Predicated region
    $region18: #{tpu_custom_call.1} parent=1 // pred_check
      _
    $region19: #{tpu_custom_call.1} parent=1 // pred_check_branch
      %41 = sbr.rel (0) target = $region21
    $region20: #{tpu_custom_call.1} parent=1 // pred_region
      %42 = dma.done [#allocation3], 256
    $region21: #{tpu_custom_call.1} parent=1 // pred_fallthru
      _
    // Predicated region
    $region22: #{tpu_custom_call.1} parent=1 // pred_check
      _
    $region23: #{tpu_custom_call.1} parent=1 // pred_check_branch
      %44 = sbr.rel (0) target = $region25
    $region24: #{tpu_custom_call.1} parent=1 // pred_region
      %45 = dma.done [#allocation6], 2048
    $region25: #{tpu_custom_call.1} parent=1 // pred_fallthru
      _
    %v46 = vld [vmem:[#allocation2] sm:$0xff]
    %v47 = vld [vmem:[#allocation2 + $0x8] sm:$0xff]
    %v48 = vld [vmem:[%s2] sm:$0x1]
    %v49 = vld [vmem:[%s3] sm:$0x1]
    %v50 = vld [vmem:[#allocation5] sm:$0xff]
    %v51 = vld [vmem:[#allocation5 + $0x8] sm:$0xff]
    %v52 = vld [vmem:[#allocation5 + $0x10] sm:$0xff]
    %v53 = vld [vmem:[#allocation5 + $0x18] sm:$0xff]
    %vm54 = vcmask 261120
    %v56 = vsel %vm54, %v46, 0
    %v59 = vsel %vm54, %v47, 0
    %61 = vmatprep.subr.mxu0 0.0
    %62 = vmatpush1.msra.mxu0 0.0
    %63 = vmatprep.subr.mxu0 0.0
    %64 = vmatpush1.msra.mxu0 0.0
    %65 = vmatprep.subr.mxu0 0.0
    %66 = vmatpush1.msra.mxu0 0.0
    %67 = vmatprep.subr.mxu0 0.0
    %68 = vmatpush1.msra.mxu0 0.0
    %69 = vmatprep.subr.mxu0 0.0
    %70 = vmatpush1.msra.mxu0 0.0
    %71 = vmatprep.subr.mxu0 0.0
    %72 = vmatpush1.msra.mxu0 0.0
    %73 = vmatprep.subr.mxu0 0.0
    %74 = vmatpush1.msra.mxu0 0.0
    %75 = vmatprep.subr.mxu0 0.0
    %76 = vmatpush1.msra.mxu0 0.0
    %77 = vmatprep.subr.mxu0 0.0
    %78 = vmatpush1.msra.mxu0 0.0
    %79 = vmatprep.subr.mxu0 0.0
    %80 = vmatpush1.msra.mxu0 0.0
    %81 = vmatprep.subr.mxu0 0.0
    %82 = vmatpush1.msra.mxu0 0.0
    %83 = vmatprep.subr.mxu0 0.0
    %84 = vmatpush1.msra.mxu0 0.0
    %85 = vmatprep.subr.mxu0 0.0
    %86 = vmatpush1.msra.mxu0 %v53
    %87 = vmatprep.subr.mxu0 0.0
    %88 = vmatpush1.msra.mxu0 %v52
    %89 = vmatprep.subr.mxu0 0.0
    %90 = vmatpush1.msra.mxu0 %v51
    %91 = vmatprep.subr.mxu0 0.0
    %92 = vmatpush1.msra.mxu0 %v50
    %93 = vmatprep.subr.mxu0 0.0
    %94 = vmatpush2.msra.mxu0 0.0
    %95 = vmatprep.subr.mxu0 0.0
    %96 = vmatpush2.msra.mxu0 0.0
    %97 = vmatprep.subr.mxu0 0.0
    %98 = vmatpush2.msra.mxu0 0.0
    %99 = vmatprep.subr.mxu0 0.0
    %100 = vmatpush2.msra.mxu0 0.0
    %101 = vmatprep.subr.mxu0 0.0
    %102 = vmatpush2.msra.mxu0 0.0
    %103 = vmatprep.subr.mxu0 0.0
    %104 = vmatpush2.msra.mxu0 0.0
    %105 = vmatprep.subr.mxu0 0.0
    %106 = vmatpush2.msra.mxu0 0.0
    %107 = vmatprep.subr.mxu0 0.0
    %108 = vmatpush2.msra.mxu0 0.0
    %109 = vmatprep.subr.mxu0 0.0
    %110 = vmatpush2.msra.mxu0 0.0
    %111 = vmatprep.subr.mxu0 0.0
    %112 = vmatpush2.msra.mxu0 0.0
    %113 = vmatprep.subr.mxu0 0.0
    %114 = vmatpush2.msra.mxu0 0.0
    %115 = vmatprep.subr.mxu0 0.0
    %116 = vmatpush2.msra.mxu0 0.0
    %117 = vmatprep.subr.mxu0 0.0
    %118 = vmatpush2.msra.mxu0 0.0
    %119 = vmatprep.subr.mxu0 0.0
    %120 = vmatpush2.msra.mxu0 0.0
    %121 = vmatprep.subr.mxu0 0.0
    %122 = vmatpush2.msra.mxu0 0.0
    %123 = vmatprep.subr.mxu0 0.0
    %124 = vmatpush2.msra.mxu0 0.0
    %125 = vmatprep.mubr.f32.mxu0 0.0
    %126 = vmatmul.mubr.f32.gmra.mxu0 %v56
    %v127 = vpop.f32.mrf.mxu0
    %v128 = vadd.f32 0.0, %v127
    %v129 = vpop.f32.mrf.mxu0
    %130 = vmatprep.mubr.f32.mxu0 0.0
    %131 = vmatmul.mubr.f32.gmra.mxu0 %v59
    %v132 = vpop.f32.mrf.mxu0
    %v133 = vadd.f32 0.0, %v132
    %v134 = vpop.f32.mrf.mxu0
    %135 = vdwg.mxu0
    %v136 = vsel %vm54, %v128, 0.0
    %137 = vadd.xlane.f32.xlu0 %v136
    %v138 = vpop.xlane.xlu0 %137
    %v139 = vsel %vm54, %v133, 0.0
    %140 = vadd.xlane.f32.xlu0 %v139
    %v141 = vpop.xlane.xlu0 %140
    %v142 = vmul.f32 %v138, 0.03125
    %v143 = vmul.f32 %v141, 0.03125
    %v144 = vsub.f32 %v128, %v142
    %v145 = vsub.f32 %v133, %v143
    %v146 = vmul.f32 %v144, %v144
    %v147 = vmul.f32 %v145, %v145
    %v148 = vsel %vm54, %v146, 0.0
    %149 = vadd.xlane.f32.xlu0 %v148
    %v150 = vpop.xlane.xlu0 %149
    %v151 = vsel %vm54, %v147, 0.0
    %152 = vadd.xlane.f32.xlu0 %v151
    %v153 = vpop.xlane.xlu0 %152
    %v154 = vmul.f32 %v150, 0.03125
    %v155 = vmul.f32 %v153, 0.03125
    %v156 = vadd.f32 %v154, 1e-05
    %v157 = vadd.f32 %v155, 1e-05
    %v158 = vrsqrt.pop %v156
    %v159 = vrsqrt.pop %v157
    %v160 = vmul.f32 %v144, %v158
    %v161 = vmul.f32 %v145, %v159
    %v163 = vlaneseq
    %v164 = vshrl.u32 %v163, 7
    %v165 = vsub.s32 0, %v164
    %v166 = vrot.slane %v48, %v165
    %v168 = vmul.f32 %v160, %v166
    %v169 = vmul.f32 %v161, %v166
    %v171 = vlaneseq
    %v172 = vshrl.u32 %v171, 7
    %v173 = vsub.s32 0, %v172
    %v174 = vrot.slane %v49, %v173
    %v176 = vadd.f32 %v168, %v174
    %v177 = vadd.f32 %v169, %v174
    %178 = vst.msk [vmem:[#allocation7] sm:$0xff] %vm54, %v176
    %179 = vst.msk [vmem:[#allocation7 + $0x8] sm:$0xff] %vm54, %v177
    %s180 = scalar_lea.vmem [#allocation5], 32
    %v181 = vld [vmem:[%s180] sm:$0xff]
    %v182 = vld [vmem:[%s180 + $0x8] sm:$0xff]
    %v183 = vld [vmem:[%s180 + $0x10] sm:$0xff]
    %v184 = vld [vmem:[%s180 + $0x18] sm:$0xff]
    %185 = vmatprep.subr.mxu0 0.0
    %186 = vmatpush1.msra.mxu0 0.0
    %187 = vmatprep.subr.mxu0 0.0
    %188 = vmatpush1.msra.mxu0 0.0
    %189 = vmatprep.subr.mxu0 0.0
    %190 = vmatpush1.msra.mxu0 0.0
    %191 = vmatprep.subr.mxu0 0.0
    %192 = vmatpush1.msra.mxu0 0.0
    %193 = vmatprep.subr.mxu0 0.0
    %194 = vmatpush1.msra.mxu0 0.0
    %195 = vmatprep.subr.mxu0 0.0
    %196 = vmatpush1.msra.mxu0 0.0
    %197 = vmatprep.subr.mxu0 0.0
    %198 = vmatpush1.msra.mxu0 0.0
    %199 = vmatprep.subr.mxu0 0.0
    %200 = vmatpush1.msra.mxu0 0.0
    %201 = vmatprep.subr.mxu0 0.0
    %202 = vmatpush1.msra.mxu0 0.0
    %203 = vmatprep.subr.mxu0 0.0
    %204 = vmatpush1.msra.mxu0 0.0
    %205 = vmatprep.subr.mxu0 0.0
    %206 = vmatpush1.msra.mxu0 0.0
    %207 = vmatprep.subr.mxu0 0.0
    %208 = vmatpush1.msra.mxu0 0.0
    %209 = vmatprep.subr.mxu0 0.0
    %210 = vmatpush1.msra.mxu0 %v184
    %211 = vmatprep.subr.mxu0 0.0
    %212 = vmatpush1.msra.mxu0 %v183
    %213 = vmatprep.subr.mxu0 0.0
    %214 = vmatpush1.msra.mxu0 %v182
    %215 = vmatprep.subr.mxu0 0.0
    %216 = vmatpush1.msra.mxu0 %v181
    %217 = vmatprep.subr.mxu0 0.0
    %218 = vmatpush2.msra.mxu0 0.0
    %219 = vmatprep.subr.mxu0 0.0
    %220 = vmatpush2.msra.mxu0 0.0
    %221 = vmatprep.subr.mxu0 0.0
    %222 = vmatpush2.msra.mxu0 0.0
    %223 = vmatprep.subr.mxu0 0.0
    %224 = vmatpush2.msra.mxu0 0.0
    %225 = vmatprep.subr.mxu0 0.0
    %226 = vmatpush2.msra.mxu0 0.0
    %227 = vmatprep.subr.mxu0 0.0
    %228 = vmatpush2.msra.mxu0 0.0
    %229 = vmatprep.subr.mxu0 0.0
    %230 = vmatpush2.msra.mxu0 0.0
    %231 = vmatprep.subr.mxu0 0.0
    %232 = vmatpush2.msra.mxu0 0.0
    %233 = vmatprep.subr.mxu0 0.0
    %234 = vmatpush2.msra.mxu0 0.0
    %235 = vmatprep.subr.mxu0 0.0
    %236 = vmatpush2.msra.mxu0 0.0
    %237 = vmatprep.subr.mxu0 0.0
    %238 = vmatpush2.msra.mxu0 0.0
    %239 = vmatprep.subr.mxu0 0.0
    %240 = vmatpush2.msra.mxu0 0.0
    %241 = vmatprep.subr.mxu0 0.0
    %242 = vmatpush2.msra.mxu0 0.0
    %243 = vmatprep.subr.mxu0 0.0
    %244 = vmatpush2.msra.mxu0 0.0
    %245 = vmatprep.subr.mxu0 0.0
    %246 = vmatpush2.msra.mxu0 0.0
    %247 = vmatprep.subr.mxu0 0.0
    %248 = vmatpush2.msra.mxu0 0.0
    %249 = vmatprep.mubr.f32.mxu0 0.0
    %250 = vmatmul.mubr.f32.gmra.mxu0 %v56
    %v251 = vpop.f32.mrf.mxu0
    %v252 = vadd.f32 0.0, %v251
    %v253 = vpop.f32.mrf.mxu0
    %254 = vmatprep.mubr.f32.mxu0 0.0
    %255 = vmatmul.mubr.f32.gmra.mxu0 %v59
    %v256 = vpop.f32.mrf.mxu0
    %v257 = vadd.f32 0.0, %v256
    %v258 = vpop.f32.mrf.mxu0
    %259 = vdwg.mxu0
    %v260 = vsel %vm54, %v252, 0.0
    %261 = vadd.xlane.f32.xlu0 %v260
    %v262 = vpop.xlane.xlu0 %261
    %v263 = vsel %vm54, %v257, 0.0
    %264 = vadd.xlane.f32.xlu0 %v263
    %v265 = vpop.xlane.xlu0 %264
    %v266 = vmul.f32 %v262, 0.03125
    %v267 = vmul.f32 %v265, 0.03125
    %v268 = vsub.f32 %v252, %v266
    %v269 = vsub.f32 %v257, %v267
    %v270 = vmul.f32 %v268, %v268
    %v271 = vmul.f32 %v269, %v269
    %v272 = vsel %vm54, %v270, 0.0
    %273 = vadd.xlane.f32.xlu0 %v272
    %v274 = vpop.xlane.xlu0 %273
    %v275 = vsel %vm54, %v271, 0.0
    %276 = vadd.xlane.f32.xlu0 %v275
    %v277 = vpop.xlane.xlu0 %276
    %v278 = vmul.f32 %v274, 0.03125
    %v279 = vmul.f32 %v277, 0.03125
    %v280 = vadd.f32 %v278, 1e-05
    %v281 = vadd.f32 %v279, 1e-05
    %v282 = vrsqrt.pop %v280
    %v283 = vrsqrt.pop %v281
    %v284 = vmul.f32 %v268, %v282
    %v285 = vmul.f32 %v269, %v283
    %v286 = vmul.f32 %v284, %v166
    %v287 = vmul.f32 %v285, %v166
    %v288 = vadd.f32 %v286, %v174
    %v289 = vadd.f32 %v287, %v174
    %292 = vrot.lane.b32.xlu0 %v288, 32
    %v293 = vpop.permute.xlu0 %292
    %294 = vrot.lane.b32.xlu0 %v289, 32
    %v295 = vpop.permute.xlu0 %294
    %vm298 = vcmask 523520
    %299 = vst.msk [vmem:[#allocation7] sm:$0xff] %vm298, %v293
    %300 = vst.msk [vmem:[#allocation7 + $0x8] sm:$0xff] %vm298, %v295
    %s301 = scalar_lea.vmem [#allocation5], 64
    %v302 = vld [vmem:[%s301] sm:$0xff]
    %v303 = vld [vmem:[%s301 + $0x8] sm:$0xff]
    %v304 = vld [vmem:[%s301 + $0x10] sm:$0xff]
    %v305 = vld [vmem:[%s301 + $0x18] sm:$0xff]
    %306 = vmatprep.subr.mxu0 0.0
    %307 = vmatpush1.msra.mxu0 0.0
    %308 = vmatprep.subr.mxu0 0.0
    %309 = vmatpush1.msra.mxu0 0.0
    %310 = vmatprep.subr.mxu0 0.0
    %311 = vmatpush1.msra.mxu0 0.0
    %312 = vmatprep.subr.mxu0 0.0
    %313 = vmatpush1.msra.mxu0 0.0
    %314 = vmatprep.subr.mxu0 0.0
    %315 = vmatpush1.msra.mxu0 0.0
    %316 = vmatprep.subr.mxu0 0.0
    %317 = vmatpush1.msra.mxu0 0.0
    %318 = vmatprep.subr.mxu0 0.0
    %319 = vmatpush1.msra.mxu0 0.0
    %320 = vmatprep.subr.mxu0 0.0
    %321 = vmatpush1.msra.mxu0 0.0
    %322 = vmatprep.subr.mxu0 0.0
    %323 = vmatpush1.msra.mxu0 0.0
    %324 = vmatprep.subr.mxu0 0.0
    %325 = vmatpush1.msra.mxu0 0.0
    %326 = vmatprep.subr.mxu0 0.0
    %327 = vmatpush1.msra.mxu0 0.0
    %328 = vmatprep.subr.mxu0 0.0
    %329 = vmatpush1.msra.mxu0 0.0
    %330 = vmatprep.subr.mxu0 0.0
    %331 = vmatpush1.msra.mxu0 %v305
    %332 = vmatprep.subr.mxu0 0.0
    %333 = vmatpush1.msra.mxu0 %v304
    %334 = vmatprep.subr.mxu0 0.0
    %335 = vmatpush1.msra.mxu0 %v303
    %336 = vmatprep.subr.mxu0 0.0
    %337 = vmatpush1.msra.mxu0 %v302
    %338 = vmatprep.subr.mxu0 0.0
    %339 = vmatpush2.msra.mxu0 0.0
    %340 = vmatprep.subr.mxu0 0.0
    %341 = vmatpush2.msra.mxu0 0.0
    %342 = vmatprep.subr.mxu0 0.0
    %343 = vmatpush2.msra.mxu0 0.0
    %344 = vmatprep.subr.mxu0 0.0
    %345 = vmatpush2.msra.mxu0 0.0
    %346 = vmatprep.subr.mxu0 0.0
    %347 = vmatpush2.msra.mxu0 0.0
    %348 = vmatprep.subr.mxu0 0.0
    %349 = vmatpush2.msra.mxu0 0.0
    %350 = vmatprep.subr.mxu0 0.0
    %351 = vmatpush2.msra.mxu0 0.0
    %352 = vmatprep.subr.mxu0 0.0
    %353 = vmatpush2.msra.mxu0 0.0
    %354 = vmatprep.subr.mxu0 0.0
    %355 = vmatpush2.msra.mxu0 0.0
    %356 = vmatprep.subr.mxu0 0.0
    %357 = vmatpush2.msra.mxu0 0.0
    %358 = vmatprep.subr.mxu0 0.0
    %359 = vmatpush2.msra.mxu0 0.0
    %360 = vmatprep.subr.mxu0 0.0
    %361 = vmatpush2.msra.mxu0 0.0
    %362 = vmatprep.subr.mxu0 0.0
    %363 = vmatpush2.msra.mxu0 0.0
    %364 = vmatprep.subr.mxu0 0.0
    %365 = vmatpush2.msra.mxu0 0.0
    %366 = vmatprep.subr.mxu0 0.0
    %367 = vmatpush2.msra.mxu0 0.0
    %368 = vmatprep.subr.mxu0 0.0
    %369 = vmatpush2.msra.mxu0 0.0
    %370 = vmatprep.mubr.f32.mxu0 0.0
    %371 = vmatmul.mubr.f32.gmra.mxu0 %v56
    %v372 = vpop.f32.mrf.mxu0
    %v373 = vadd.f32 0.0, %v372
    %v374 = vpop.f32.mrf.mxu0
    %375 = vmatprep.mubr.f32.mxu0 0.0
    %376 = vmatmul.mubr.f32.gmra.mxu0 %v59
    %v377 = vpop.f32.mrf.mxu0
    %v378 = vadd.f32 0.0, %v377
    %v379 = vpop.f32.mrf.mxu0
    %380 = vdwg.mxu0
    %v381 = vsel %vm54, %v373, 0.0
    %382 = vadd.xlane.f32.xlu0 %v381
    %v383 = vpop.xlane.xlu0 %382
    %v384 = vsel %vm54, %v378, 0.0
    %385 = vadd.xlane.f32.xlu0 %v384
    %v386 = vpop.xlane.xlu0 %385
    %v387 = vmul.f32 %v383, 0.03125
    %v388 = vmul.f32 %v386, 0.03125
    %v389 = vsub.f32 %v373, %v387
    %v390 = vsub.f32 %v378, %v388
    %v391 = vmul.f32 %v389, %v389
    %v392 = vmul.f32 %v390, %v390
    %v393 = vsel %vm54, %v391, 0.0
    %394 = vadd.xlane.f32.xlu0 %v393
    %v395 = vpop.xlane.xlu0 %394
    %v396 = vsel %vm54, %v392, 0.0
    %397 = vadd.xlane.f32.xlu0 %v396
    %v398 = vpop.xlane.xlu0 %397
    %v399 = vmul.f32 %v395, 0.03125
    %v400 = vmul.f32 %v398, 0.03125
    %v401 = vadd.f32 %v399, 1e-05
    %v402 = vadd.f32 %v400, 1e-05
    %v403 = vrsqrt.pop %v401
    %v404 = vrsqrt.pop %v402
    %v405 = vmul.f32 %v389, %v403
    %v406 = vmul.f32 %v390, %v404
    %v407 = vmul.f32 %v405, %v166
    %v408 = vmul.f32 %v406, %v166
    %v409 = vadd.f32 %v407, %v174
    %v410 = vadd.f32 %v408, %v174
    %413 = vrot.lane.b32.xlu0 %v409, 64
    %v414 = vpop.permute.xlu0 %413
    %415 = vrot.lane.b32.xlu0 %v410, 64
    %v416 = vpop.permute.xlu0 %415
    %vm419 = vcmask 785920
    %420 = vst.msk [vmem:[#allocation7] sm:$0xff] %vm419, %v414
    %421 = vst.msk [vmem:[#allocation7 + $0x8] sm:$0xff] %vm419, %v416
    %s422 = scalar_lea.vmem [#allocation5], 96
    %v423 = vld [vmem:[%s422] sm:$0xff]
    %v424 = vld [vmem:[%s422 + $0x8] sm:$0xff]
    %v425 = vld [vmem:[%s422 + $0x10] sm:$0xff]
    %v426 = vld [vmem:[%s422 + $0x18] sm:$0xff]
    %427 = vmatprep.subr.mxu0 0.0
    %428 = vmatpush1.msra.mxu0 0.0
    %429 = vmatprep.subr.mxu0 0.0
    %430 = vmatpush1.msra.mxu0 0.0
    %431 = vmatprep.subr.mxu0 0.0
    %432 = vmatpush1.msra.mxu0 0.0
    %433 = vmatprep.subr.mxu0 0.0
    %434 = vmatpush1.msra.mxu0 0.0
    %435 = vmatprep.subr.mxu0 0.0
    %436 = vmatpush1.msra.mxu0 0.0
    %437 = vmatprep.subr.mxu0 0.0
    %438 = vmatpush1.msra.mxu0 0.0
    %439 = vmatprep.subr.mxu0 0.0
    %440 = vmatpush1.msra.mxu0 0.0
    %441 = vmatprep.subr.mxu0 0.0
    %442 = vmatpush1.msra.mxu0 0.0
    %443 = vmatprep.subr.mxu0 0.0
    %444 = vmatpush1.msra.mxu0 0.0
    %445 = vmatprep.subr.mxu0 0.0
    %446 = vmatpush1.msra.mxu0 0.0
    %447 = vmatprep.subr.mxu0 0.0
    %448 = vmatpush1.msra.mxu0 0.0
    %449 = vmatprep.subr.mxu0 0.0
    %450 = vmatpush1.msra.mxu0 0.0
    %451 = vmatprep.subr.mxu0 0.0
    %452 = vmatpush1.msra.mxu0 %v426
    %453 = vmatprep.subr.mxu0 0.0
    %454 = vmatpush1.msra.mxu0 %v425
    %455 = vmatprep.subr.mxu0 0.0
    %456 = vmatpush1.msra.mxu0 %v424
    %457 = vmatprep.subr.mxu0 0.0
    %458 = vmatpush1.msra.mxu0 %v423
    %459 = vmatprep.subr.mxu0 0.0
    %460 = vmatpush2.msra.mxu0 0.0
    %461 = vmatprep.subr.mxu0 0.0
    %462 = vmatpush2.msra.mxu0 0.0
    %463 = vmatprep.subr.mxu0 0.0
    %464 = vmatpush2.msra.mxu0 0.0
    %465 = vmatprep.subr.mxu0 0.0
    %466 = vmatpush2.msra.mxu0 0.0
    %467 = vmatprep.subr.mxu0 0.0
    %468 = vmatpush2.msra.mxu0 0.0
    %469 = vmatprep.subr.mxu0 0.0
    %470 = vmatpush2.msra.mxu0 0.0
    %471 = vmatprep.subr.mxu0 0.0
    %472 = vmatpush2.msra.mxu0 0.0
    %473 = vmatprep.subr.mxu0 0.0
    %474 = vmatpush2.msra.mxu0 0.0
    %475 = vmatprep.subr.mxu0 0.0
    %476 = vmatpush2.msra.mxu0 0.0
    %477 = vmatprep.subr.mxu0 0.0
    %478 = vmatpush2.msra.mxu0 0.0
    %479 = vmatprep.subr.mxu0 0.0
    %480 = vmatpush2.msra.mxu0 0.0
    %481 = vmatprep.subr.mxu0 0.0
    %482 = vmatpush2.msra.mxu0 0.0
    %483 = vmatprep.subr.mxu0 0.0
    %484 = vmatpush2.msra.mxu0 0.0
    %485 = vmatprep.subr.mxu0 0.0
    %486 = vmatpush2.msra.mxu0 0.0
    %487 = vmatprep.subr.mxu0 0.0
    %488 = vmatpush2.msra.mxu0 0.0
    %489 = vmatprep.subr.mxu0 0.0
    %490 = vmatpush2.msra.mxu0 0.0
    %491 = vmatprep.mubr.f32.mxu0 0.0
    %492 = vmatmul.mubr.f32.gmra.mxu0 %v56
    %v493 = vpop.f32.mrf.mxu0
    %v494 = vadd.f32 0.0, %v493
    %v495 = vpop.f32.mrf.mxu0
    %496 = vmatprep.mubr.f32.mxu0 0.0
    %497 = vmatmul.mubr.f32.gmra.mxu0 %v59
    %v498 = vpop.f32.mrf.mxu0
    %v499 = vadd.f32 0.0, %v498
    %v500 = vpop.f32.mrf.mxu0
    %501 = vdwg.mxu0
    %v502 = vsel %vm54, %v494, 0.0
    %503 = vadd.xlane.f32.xlu0 %v502
    %v504 = vpop.xlane.xlu0 %503
    %v505 = vsel %vm54, %v499, 0.0
    %506 = vadd.xlane.f32.xlu0 %v505
    %v507 = vpop.xlane.xlu0 %506
    %v508 = vmul.f32 %v504, 0.03125
    %v509 = vmul.f32 %v507, 0.03125
    %v510 = vsub.f32 %v494, %v508
    %v511 = vsub.f32 %v499, %v509
    %v512 = vmul.f32 %v510, %v510
    %v513 = vmul.f32 %v511, %v511
    %v514 = vsel %vm54, %v512, 0.0
    %515 = vadd.xlane.f32.xlu0 %v514
    %v516 = vpop.xlane.xlu0 %515
    %v517 = vsel %vm54, %v513, 0.0
    %518 = vadd.xlane.f32.xlu0 %v517
    %v519 = vpop.xlane.xlu0 %518
    %v520 = vmul.f32 %v516, 0.03125
    %v521 = vmul.f32 %v519, 0.03125
    %v522 = vadd.f32 %v520, 1e-05
    %v523 = vadd.f32 %v521, 1e-05
    %v524 = vrsqrt.pop %v522
    %v525 = vrsqrt.pop %v523
    %v526 = vmul.f32 %v510, %v524
    %v527 = vmul.f32 %v511, %v525
    %v528 = vmul.f32 %v526, %v166
    %v529 = vmul.f32 %v527, %v166
    %v530 = vadd.f32 %v528, %v174
    %v531 = vadd.f32 %v529, %v174
    %534 = vrot.lane.b32.xlu0 %v530, 96
    %v535 = vpop.permute.xlu0 %534
    %536 = vrot.lane.b32.xlu0 %v531, 96
    %v537 = vpop.permute.xlu0 %536
    %vm540 = vcmask 1048320
    %541 = vst.msk [vmem:[#allocation7] sm:$0xff] %vm540, %v535
    %542 = vst.msk [vmem:[#allocation7 + $0x8] sm:$0xff] %vm540, %v537
    // Predicated region
    $region26: #{tpu_custom_call.1} parent=1 // pred_check
      _
    $region27: #{tpu_custom_call.1} parent=1 // pred_check_branch
      %544 = sbr.rel (0) target = $region29
    $region28: #{tpu_custom_call.1} parent=1 // pred_region
      %s546 = ssub.s32 256, 256
      %547 = vsyncadd [#allocation4], %s546
      %s548 = sshll.u32 [#allocation7], 4
      %s549 = int_to_ptr.vmem [resolvable:$true] %s548
      %554 = dma.vmem_to_hbm [thread:$0]  %s549, 256, %s4, [#allocation4], 128, 128, 8
    $region29: #{tpu_custom_call.1} parent=1 // pred_fallthru
      _
    // Predicated region
    $region30: #{tpu_custom_call.1} parent=1 // pred_check
      _
    $region31: #{tpu_custom_call.1} parent=1 // pred_check_branch
      %556 = sbr.rel (0) target = $region33
    $region32: #{tpu_custom_call.1} parent=1 // pred_region
      %557 = dma.done [#allocation4], 256
    $region33: #{tpu_custom_call.1} parent=1 // pred_fallthru
      _
    %558 = vsyncpa [#allocation3], 1
    %559 = vsyncpa [#allocation6], 1
    %560 = vsyncpa [#allocation4], 1

</llo_original>
